<compile_context>
chip_gen: v7x
topology: tpu7x:2x2x1
jax: 0.10.0
libtpu: 0.0.40
codegen_flags: <defaults>
</compile_context>

<pallas_src>
import functools
import math

import jax
import jax.numpy as jnp
from jax.experimental import pallas as pl
from jax.experimental.pallas import tpu as pltpu


def _cpe_kernel(emb_ref, sin_ref, out_ref, *, dim: int, scale: float):
    # emb_ref : (TL, B, D)   sin_ref : (TL, 1, D)   out_ref : (TL, B, 2*D)
    scaled = emb_ref[...] * jnp.asarray(scale, dtype=emb_ref.dtype)      # emb * sqrt(dim) (VPU)
    out_ref[:, :, :dim] = scaled.astype(out_ref.dtype)                   # real half (eval dropout = id)
    out_ref[:, :, dim:] = (scaled * sin_ref[...]).astype(out_ref.dtype)  # imag half, bcast over B


def make_wposition(dim: int, max_len: int = 5000, dtype=jnp.float32):
    """Deterministic buffer identical to the PyTorch __init__ registration."""
    position = jnp.arange(1.0, max_len + 1.0, dtype=dtype)[:, None]          # (max_len, 1)
    div_term = jnp.exp(jnp.arange(0.0, dim, 1.0, dtype=dtype)
                       * (-(math.log(10000.0) / dim)))                       # (dim,)
    wposition = position * div_term                                          # (max_len, dim)
    return wposition[:, None, :]                                             # (max_len, 1, dim)


def make_sin_wposition(dim: int, max_len: int = 5000, dtype=jnp.float32):
    """Constant sin(wposition): evaluated once in f32, stored in the embedding dtype so the
    kernel body stays in one dtype (no per-element promote/demote; halves sin DMA for bf16)."""
    return jnp.sin(make_wposition(dim, max_len=max_len, dtype=jnp.float32)).astype(dtype)


# Per-tile combined (emb + sin + out) footprint target.  x2 double-buffering ~= 40 MiB,
# which fits v7x's 64 MiB VMEM and sits well past the ~85%-of-roofline tile-size knee.
_TILE_FOOTPRINT_BYTES = 20 << 20


def _pick_tile_l(L: int, B: int, D: int, itemsize: int) -> int:
    row_bytes = (B * D + D + B * 2 * D) * itemsize          # emb row + sin row + out row
    tl = max(1, _TILE_FOOTPRINT_BYTES // max(row_bytes, 1))
    # Keep at least 2 grid steps so megacore (v7x, "parallel") can shard L over both TCs.
    tl = min(tl, max(1, (L + 1) // 2))
    return int(max(1, min(tl, L)))


def complex_position_encoding(emb: jax.Array, sin_wpos: jax.Array, dim: int,
                              *, tile_l: int | None = None) -> jax.Array:
    """emb: (L, B, D); sin_wpos: (max_len, 1, D) = sin(wposition); returns (L, B, 2*D)."""
    L, B, D = emb.shape
    assert D == dim
    assert sin_wpos.shape[0] >= L and sin_wpos.shape[1] == 1 and sin_wpos.shape[2] == D

    sin_wpos = sin_wpos.astype(emb.dtype)   # no-op when dtypes already match

    itemsize = emb.dtype.itemsize
    if tile_l is None:
        tile_l = _pick_tile_l(L, B, D, itemsize)
    tile_l = max(1, min(tile_l, L))

    # Double-buffered VMEM footprint (+20% headroom); raise the scoped-VMEM limit so large
    # tiles aren't blocked by the 16 MiB (v5e) / 32 MiB (v6e, v7x) scoped defaults.
    tile_bytes = tile_l * (B * D + D + B * 2 * D) * itemsize
    vmem_limit = max(32 << 20, int(2 * tile_bytes * 1.2))

    kernel = functools.partial(_cpe_kernel, dim=dim, scale=math.sqrt(dim))

    bytes_accessed = (L * B * D + L * D + L * B * 2 * D) * itemsize

    return pl.pallas_call(
        kernel,
        out_shape=jax.ShapeDtypeStruct((L, B, 2 * D), emb.dtype),
        grid_spec=pltpu.PrefetchScalarGridSpec(
            num_scalar_prefetch=0,
            grid=(pl.cdiv(L, tile_l),),
            in_specs=[
                pl.BlockSpec((tile_l, B, D), lambda i: (i, 0, 0)),
                # full sin buffer passed in; BlockSpec fetches only rows of tile i
                pl.BlockSpec((tile_l, 1, D), lambda i: (i, 0, 0)),
            ],
            out_specs=pl.BlockSpec((tile_l, B, 2 * D), lambda i: (i, 0, 0)),
        ),
        compiler_params=pltpu.CompilerParams(
            dimension_semantics=("parallel",),   # shards L-tiles across v7x's 2 TCs
            vmem_limit_bytes=vmem_limit,
        ),
        cost_estimate=pl.CostEstimate(
            flops=2 * L * B * D,
            transcendentals=0,
            bytes_accessed=bytes_accessed,
        ),
    )(emb, sin_wpos)


def reference(emb, wposition, dim):
    L = emb.shape[0]
    scaled = emb * math.sqrt(dim)
    sin = jnp.sin(wposition[:L])
    emb_img = scaled * sin
    emb_real = scaled  # eval-mode dropout
    return jnp.concatenate([emb_real, emb_img], axis=2)


if __name__ == "__main__":
    # Small but tile-friendly shapes: D multiple of 128 (lane-dense stores), B fills sublanes.
    L, B, D = 16, 8, 128
    max_len = 64

    key = jax.random.PRNGKey(0)
    emb = jax.random.normal(key, (L, B, D), dtype=jnp.float32)

    wposition = make_wposition(D, max_len=max_len)                       # reference buffer
    sin_wpos = make_sin_wposition(D, max_len=max_len, dtype=emb.dtype)   # precomputed constant

    # Auto tile selection: picks tile_l = L//2 = 8 here -> grid of 2 steps, exercising
    # both the pipelined tiling path and the megacore-friendly >=2-step grid.
    out = complex_position_encoding(emb, sin_wpos, D)
    out = jax.block_until_ready(out)

    ref = reference(emb, wposition, D)
    assert out.shape == (L, B, 2 * D), out.shape
    assert jnp.allclose(out, ref, atol=1e-5, rtol=1e-5), "mismatch vs reference"

    print("KERNEL_OK")
</pallas_src>

<mosaic_0001>
module attributes {stable_mosaic.version = 11 : i64} {
  func.func @_cpe_kernel(%arg0: i32, %arg1: memref<8x8x128xf32, #tpu.memory_space<vmem>>, %arg2: memref<8x1x128xf32, #tpu.memory_space<vmem>>, %arg3: memref<8x8x256xf32, #tpu.memory_space<vmem>>) attributes {dimension_semantics = [#tpu.dimension_semantics<parallel>], iteration_bounds = array<i64: 2>, scalar_prefetch = 0 : i64, scratch_operands = 0 : i64, tpu.core_type = #tpu.core_type<tc>, window_params = [{transform_indices = @transform_0, window_bounds = array<i64: 8, 8, 128>}, {transform_indices = @transform_1, window_bounds = array<i64: 8, 1, 128>}, {transform_indices = @transform_2, window_bounds = array<i64: 8, 8, 256>}]} {
    %c0 = arith.constant 0 : index
    %c0_0 = arith.constant 0 : index
    %c0_1 = arith.constant 0 : index
    %0 = vector.load %arg1[%c0, %c0_0, %c0_1] : memref<8x8x128xf32, #tpu.memory_space<vmem>>, vector<8x8x128xf32>
    %cst = arith.constant 11.3137083 : f32
    %1 = vector.broadcast %cst : f32 to vector<8x8x128xf32>
    %2 = arith.mulf %0, %1 : vector<8x8x128xf32>
    %c0_2 = arith.constant 0 : index
    %c0_3 = arith.constant 0 : index
    %c0_4 = arith.constant 0 : index
    %3 = vector.load %arg3[%c0_2, %c0_3, %c0_4] : memref<8x8x256xf32, #tpu.memory_space<vmem>>, vector<8x8x128xf32>
    tpu.vector_store %arg3[%c0_2, %c0_3, %c0_4], %2 {strides = array<i32>} : memref<8x8x256xf32, #tpu.memory_space<vmem>>, vector<8x8x128xf32>,
    %c0_5 = arith.constant 0 : index
    %c0_6 = arith.constant 0 : index
    %c0_7 = arith.constant 0 : index
    %4 = vector.load %arg2[%c0_5, %c0_6, %c0_7] : memref<8x1x128xf32, #tpu.memory_space<vmem>>, vector<8x1x128xf32>
    %5 = vector.broadcast %4 : vector<8x1x128xf32> to vector<8x8x128xf32>
    %6 = arith.mulf %2, %5 : vector<8x8x128xf32>
    %c0_8 = arith.constant 0 : index
    %c0_9 = arith.constant 0 : index
    %c128 = arith.constant 128 : index
    %7 = vector.load %arg3[%c0_8, %c0_9, %c128] : memref<8x8x256xf32, #tpu.memory_space<vmem>>, vector<8x8x128xf32>
    tpu.vector_store %arg3[%c0_8, %c0_9, %c128], %6 {strides = array<i32>} : memref<8x8x256xf32, #tpu.memory_space<vmem>>, vector<8x8x128xf32>,
    return
  }
  func.func @transform_0(%arg0: i32) -> (i32, i32, i32) {
    %c0_i32 = arith.constant 0 : i32
    %c0_i32_0 = arith.constant 0 : i32
    %c0_i32_1 = arith.constant 0 : i32
    return %arg0, %c0_i32, %c0_i32_0 : i32, i32, i32
  }
  func.func @transform_1(%arg0: i32) -> (i32, i32, i32) {
    %c0_i32 = arith.constant 0 : i32
    %c0_i32_0 = arith.constant 0 : i32
    %c0_i32_1 = arith.constant 0 : i32
    return %arg0, %c0_i32, %c0_i32_0 : i32, i32, i32
  }
  func.func @transform_2(%arg0: i32) -> (i32, i32, i32) {
    %c0_i32 = arith.constant 0 : i32
    %c0_i32_0 = arith.constant 0 : i32
    %c0_i32_1 = arith.constant 0 : i32
    return %arg0, %c0_i32, %c0_i32_0 : i32, i32, i32
  }
}

</mosaic_0001>

<llo_original>
// kernel: tpu_custom_call.1
$region0: #{tpu_custom_call.1}
  #allocation0 [shape = 'u32[]', space=smem, size = 0x4, offset = 0x4, fixed_abs, tag = 'smem constant byte address 0x4 - core index']
  #allocation1 [shape = 'u32[144,128]{1,0:T(1,128)}', space=vmem, size = 0x12000, scoped, tag = 'internal scratch']
  %s0 = inlined_call_operand.hbm [shape: f32[16,8,128], index: 0, kind: input, shape index: {}]
  %s1 = inlined_call_operand.hbm [shape: f32[64,1,128], index: 1, kind: input, shape index: {}]
  %s2 = inlined_call_operand.hbm [shape: f32[16,8,256], index: 2, kind: output, shape index: {}]
  %s3 = sld [smem:[#allocation0]]
  $region49: #{tpu_custom_call.1} parent=0
    _
  %s5 = ssub.s32 1, %s3
  %s6 = scalar_select 0, %s5, %s3
  $region1: #{tpu_custom_call.1} parent=0
    #allocation2 [shape = 'u8[65536]{0}', space=vmem, size = 0x10000, scoped, tag = 'input window, operand 0']
    #allocation3 [shape = 's32[2]{0}', space=sflag, size = 0x8, scoped, tag = 'scoped memory for tpu_custom_call.1']
    #allocation4 [shape = 's32[2]{0}', space=sflag, size = 0x8, scoped, tag = 'scoped memory for tpu_custom_call.1']
    #allocation5 [shape = 'u8[8192]{0}', space=vmem, size = 0x2000, scoped, tag = 'input window, operand 1']
    #allocation6 [shape = 's32[2]{0}', space=sflag, size = 0x8, scoped, tag = 'scoped memory for tpu_custom_call.1']
    #allocation7 [shape = 'u8[131072]{0}', space=vmem, size = 0x20000, scoped, tag = 'output window, operand 0']
    %7 = vsyncpa [#allocation3], 0
    %s8 = scalar_lea.sflag [#allocation3], 1
    %9 = vsyncpa %s8, 0
    %10 = vsyncpa [#allocation6], 0
    %s11 = scalar_lea.sflag [#allocation6], 1
    %12 = vsyncpa %s11, 0
    %13 = vsyncpa [#allocation4], 0
    %s14 = scalar_lea.sflag [#allocation4], 1
    %15 = vsyncpa %s14, 0
    loop: start=0, step=1, limit=4
    $region2: #{tpu_custom_call.1} parent=1 // loop_pre_header
      _
    $region3: #{tpu_custom_call.1} parent=1 // loop_header
      %s17 = sphi 0, %s21
      %p18 = scmp.ge.s32.totalorder %s17, 4
      %s27 = sphi 0, %s29
      %s30 = sphi 0, %s27
      %s31 = sphi 0, %s30
      %s47 = sphi 0, %s31
      %s53 = sphi 0, %s55
      %s56 = sphi 0, %s53
      %s57 = sphi 0, %s56
      %s73 = sphi 0, %s57
      %s79 = sphi 0, %s81
      %s82 = sphi 0, %s79
      %s83 = sphi 0, %s82
      %s99 = sphi 0, %s83
    $region4: #{tpu_custom_call.1} parent=1 // loop_header_branch
      %20 = sbr.rel (%p18) target = $region8
    $region5: #{tpu_custom_call.1} parent=1 // loop_body
      %s22 = ssub.s32 %s17, 1
      %s23 = ssub.s32 %s17, 2
      %s24 = sadd.s32 %s17, 1
      %s25 = ssub.s32 %s17, %s24
      %p26 = scmp.eq.s32.totalorder %s25, 0
      %s28 = sadd.s32 %s27, 1
      %s29 = scalar_select %p26, %s27, %s28
      %p32 = pneg %p26
      %p33 = scmp.eq.s32.totalorder %s17, 1
      %p34 = por %p32, %p33
      %p35 = scmp.ne.s32.totalorder %s27, %s30
      %p36 = scmp.eq.s32.totalorder %s17, 0
      %p37 = por %p35, %p36
      %p38 = scmp.ne.s32.totalorder %s27, %s30
      %p39 = scmp.eq.s32.totalorder %s22, 1
      %p40 = por %p38, %p39
      %p41 = scmp.ne.s32.totalorder %s30, %s31
      %p42 = scmp.eq.s32.totalorder %s22, 0
      %p43 = por %p41, %p42
      %p44 = scmp.ne.s32.totalorder %s30, %s31
      %p45 = scmp.eq.s32.totalorder %s23, 1
      %p46 = por %p44, %p45
      %p48 = scmp.ne.s32.totalorder %s31, %s47
      %p49 = scmp.eq.s32.totalorder %s23, 0
      %p50 = por %p48, %p49
      %s51 = ssub.s32 %s17, %s24
      %p52 = scmp.eq.s32.totalorder %s51, 0
      %s54 = sadd.s32 %s53, 1
      %s55 = scalar_select %p52, %s53, %s54
      %p58 = pneg %p52
      %p59 = scmp.eq.s32.totalorder %s17, 1
      %p60 = por %p58, %p59
      %p61 = scmp.ne.s32.totalorder %s53, %s56
      %p62 = scmp.eq.s32.totalorder %s17, 0
      %p63 = por %p61, %p62
      %p64 = scmp.ne.s32.totalorder %s53, %s56
      %p65 = scmp.eq.s32.totalorder %s22, 1
      %p66 = por %p64, %p65
      %p67 = scmp.ne.s32.totalorder %s56, %s57
      %p68 = scmp.eq.s32.totalorder %s22, 0
      %p69 = por %p67, %p68
      %p70 = scmp.ne.s32.totalorder %s56, %s57
      %p71 = scmp.eq.s32.totalorder %s23, 1
      %p72 = por %p70, %p71
      %p74 = scmp.ne.s32.totalorder %s57, %s73
      %p75 = scmp.eq.s32.totalorder %s23, 0
      %p76 = por %p74, %p75
      %s77 = ssub.s32 %s17, %s24
      %p78 = scmp.eq.s32.totalorder %s77, 0
      %s80 = sadd.s32 %s79, 1
      %s81 = scalar_select %p78, %s79, %s80
      %p84 = pneg %p78
      %p85 = scmp.eq.s32.totalorder %s17, 1
      %p86 = por %p84, %p85
      %p87 = scmp.ne.s32.totalorder %s79, %s82
      %p88 = scmp.eq.s32.totalorder %s17, 0
      %p89 = por %p87, %p88
      %p90 = scmp.ne.s32.totalorder %s79, %s82
      %p91 = scmp.eq.s32.totalorder %s22, 1
      %p92 = por %p90, %p91
      %p93 = scmp.ne.s32.totalorder %s82, %s83
      %p94 = scmp.eq.s32.totalorder %s22, 0
      %p95 = por %p93, %p94
      %p96 = scmp.ne.s32.totalorder %s82, %s83
      %p97 = scmp.eq.s32.totalorder %s23, 1
      %p98 = por %p96, %p97
      %p100 = scmp.ne.s32.totalorder %s83, %s99
      %p101 = scmp.eq.s32.totalorder %s23, 0
      %p102 = por %p100, %p101
      %p103 = scmp.le.s32.totalorder 1, %s17
      %p104 = scmp.lt.s32.totalorder %s17, 3
      %p105 = pnand %p103, %p104
      %p106 = pneg %p105
      // Predicated region
      $region9: #{tpu_custom_call.1} parent=5 // pred_check
        _
      $region10: #{tpu_custom_call.1} parent=5 // pred_check_branch
        %108 = sbr.rel (%p105) target = $region12
      $region11: #{tpu_custom_call.1} parent=5 // pred_region
        %s109 = ssub.s32 %s17, 1
      $region12: #{tpu_custom_call.1} parent=5 // pred_fallthru
        _
      %p110 = scmp.lt.s32.totalorder %s17, 2
      // Predicated region
      $region13: #{tpu_custom_call.1} parent=5 // pred_check
        %p111 = pneg %p110
      $region14: #{tpu_custom_call.1} parent=5 // pred_check_branch
        %113 = sbr.rel (%p111) target = $region16
      $region15: #{tpu_custom_call.1} parent=5 // pred_region
        // Predicated region
        $region17: #{tpu_custom_call.1} parent=15 // pred_check
          %p114 = pneg %p37
        $region18: #{tpu_custom_call.1} parent=15 // pred_check_branch
          %116 = sbr.rel (%p114) target = $region20
        $region19: #{tpu_custom_call.1} parent=15 // pred_region
          %s117 = sand.u32 %s27, 1
          %s118 = scalar_lea.sflag [#allocation3], %s117
          %s119 = sand.u32 %s27, 1
          %s120 = smul.addr %s119, 64
          %s121 = scalar_lea.vmem [#allocation2], %s120
          %s122 = smul.u32 8, %s17
          %s124 = ssub.s32 1024, 1024
          %125 = vsyncadd %s118, %s124
          %s126 = smul.addr %s122, 128
          %s127 = scalar_lea.hbm %s0, %s126
          %s128 = sshll.u32 %s121, 4
          %s129 = int_to_ptr.vmem [resolvable:$true] %s128
          %134 = dma.hbm_to_vmem [thread:$0]  %s127, 1024, %s129, %s118, 128, 128, 8
        $region20: #{tpu_custom_call.1} parent=15 // pred_fallthru
          _
        // Predicated region
        $region21: #{tpu_custom_call.1} parent=15 // pred_check
          %p135 = pneg %p63
        $region22: #{tpu_custom_call.1} parent=15 // pred_check_branch
          %137 = sbr.rel (%p135) target = $region24
        $region23: #{tpu_custom_call.1} parent=15 // pred_region
          %s138 = sand.u32 %s53, 1
          %s139 = scalar_lea.sflag [#allocation6], %s138
          %s140 = sand.u32 %s53, 1
          %s141 = smul.addr %s140, 8
          %s142 = scalar_lea.vmem [#allocation5], %s141
          %s143 = smul.u32 8, %s17
          %s145 = ssub.s32 128, 128
          %146 = vsyncadd %s139, %s145
          %s147 = smul.addr %s143, 16
          %s148 = scalar_lea.hbm %s1, %s147
          %s149 = sshll.u32 %s142, 4
          %s150 = int_to_ptr.vmem [resolvable:$true] %s149
          %155 = dma.hbm_to_vmem [thread:$0]  %s148, 128, %s150, %s139, 16, 16, 1
        $region24: #{tpu_custom_call.1} parent=15 // pred_fallthru
          _
      $region16: #{tpu_custom_call.1} parent=5 // pred_fallthru
        _
      %p156 = scmp.le.s32.totalorder 1, %s17
      %p157 = scmp.lt.s32.totalorder %s17, 3
      %p158 = pnand %p156, %p157
      %p159 = pneg %p158
      // Predicated region
      $region25: #{tpu_custom_call.1} parent=5 // pred_check
        _
      $region26: #{tpu_custom_call.1} parent=5 // pred_check_branch
        %161 = sbr.rel (%p158) target = $region28
      $region27: #{tpu_custom_call.1} parent=5 // pred_region
        %s162 = ssub.s32 %s17, 1
        %s163 = sand.u32 %s30, 1
        %s164 = scalar_lea.sflag [#allocation3], %s163
        %s165 = sand.u32 %s30, 1
        %s166 = smul.addr %s165, 64
        %s167 = scalar_lea.vmem [#allocation2], %s166
        // Predicated region
        $region29: #{tpu_custom_call.1} parent=27 // pred_check
          %p168 = pneg %p43
        $region30: #{tpu_custom_call.1} parent=27 // pred_check_branch
          %170 = sbr.rel (%p168) target = $region32
        $region31: #{tpu_custom_call.1} parent=27 // pred_region
          %171 = dma.done %s164, 1024
        $region32: #{tpu_custom_call.1} parent=27 // pred_fallthru
          _
        %s172 = sand.u32 %s56, 1
        %s173 = scalar_lea.sflag [#allocation6], %s172
        %s174 = sand.u32 %s56, 1
        %s175 = smul.addr %s174, 8
        %s176 = scalar_lea.vmem [#allocation5], %s175
        // Predicated region
        $region33: #{tpu_custom_call.1} parent=27 // pred_check
          %p177 = pneg %p69
        $region34: #{tpu_custom_call.1} parent=27 // pred_check_branch
          %179 = sbr.rel (%p177) target = $region36
        $region35: #{tpu_custom_call.1} parent=27 // pred_region
          %180 = dma.done %s173, 128
        $region36: #{tpu_custom_call.1} parent=27 // pred_fallthru
          _
        %s181 = sand.u32 %s30, 1
        %s182 = scalar_lea.sflag [#allocation3], %s181
        %s183 = sand.u32 %s30, 1
        %s184 = smul.addr %s183, 64
        %s185 = scalar_lea.vmem [#allocation2], %s184
        %p186 = pneg %p43
        %p187 = pneg %p40
        %s188 = sand.u32 %s56, 1
        %s189 = scalar_lea.sflag [#allocation6], %s188
        %s190 = sand.u32 %s56, 1
        %s191 = smul.addr %s190, 8
        %s192 = scalar_lea.vmem [#allocation5], %s191
        %p193 = pneg %p69
        %p194 = pneg %p66
        %p195 = pneg %p95
        %p196 = pneg %p92
        %s197 = sand.u32 %s82, 1
        %s198 = scalar_lea.sflag [#allocation4], %s197
        %s199 = sand.u32 %s82, 1
        %s200 = smul.addr %s199, 128
        %s201 = scalar_lea.vmem [#allocation7], %s200
        %s202 = smul.u32 8, %s22
        %s203 = smul.u32 8, %s22
        %s204 = smul.u32 8, %s22
        %v205 = vld [vmem:[%s167] sm:$0xff]
        %v206 = vld [vmem:[%s167 + $0x8] sm:$0xff]
        %v207 = vld [vmem:[%s167 + $0x10] sm:$0xff]
        %v208 = vld [vmem:[%s167 + $0x18] sm:$0xff]
        %v209 = vld [vmem:[%s167 + $0x20] sm:$0xff]
        %v210 = vld [vmem:[%s167 + $0x28] sm:$0xff]
        %v211 = vld [vmem:[%s167 + $0x30] sm:$0xff]
        %v212 = vld [vmem:[%s167 + $0x38] sm:$0xff]
        %v213 = vmul.f32 %v205, 11.313708
        %v214 = vmul.f32 %v206, 11.313708
        %v215 = vmul.f32 %v207, 11.313708
        %v216 = vmul.f32 %v208, 11.313708
        %v217 = vmul.f32 %v209, 11.313708
        %v218 = vmul.f32 %v210, 11.313708
        %v219 = vmul.f32 %v211, 11.313708
        %v220 = vmul.f32 %v212, 11.313708
        %221 = vst [vmem:[%s201] sm:$0xff] %v213
        %222 = vst [vmem:[%s201 + $0x10] sm:$0xff] %v214
        %223 = vst [vmem:[%s201 + $0x20] sm:$0xff] %v215
        %224 = vst [vmem:[%s201 + $0x30] sm:$0xff] %v216
        %225 = vst [vmem:[%s201 + $0x40] sm:$0xff] %v217
        %226 = vst [vmem:[%s201 + $0x50] sm:$0xff] %v218
        %227 = vst [vmem:[%s201 + $0x60] sm:$0xff] %v219
        %228 = vst [vmem:[%s201 + $0x70] sm:$0xff] %v220
        %v229 = vld [vmem:[%s176] sm:$0x1]
        %v230 = vld [vmem:[%s176 + $0x1] sm:$0x1]
        %v231 = vld [vmem:[%s176 + $0x2] sm:$0x1]
        %v232 = vld [vmem:[%s176 + $0x3] sm:$0x1]
        %v233 = vld [vmem:[%s176 + $0x4] sm:$0x1]
        %v234 = vld [vmem:[%s176 + $0x5] sm:$0x1]
        %v235 = vld [vmem:[%s176 + $0x6] sm:$0x1]
        %v236 = vld [vmem:[%s176 + $0x7] sm:$0x1]
        %v245 = vlaneseq
        %v246 = vshrl.u32 %v245, 7
        %v247 = vsub.s32 0, %v246
        %v248 = vrot.slane %v229, %v247
        %v249 = vlaneseq
        %v250 = vshrl.u32 %v249, 7
        %v251 = vsub.s32 0, %v250
        %v252 = vrot.slane %v230, %v251
        %v253 = vlaneseq
        %v254 = vshrl.u32 %v253, 7
        %v255 = vsub.s32 0, %v254
        %v256 = vrot.slane %v231, %v255
        %v257 = vlaneseq
        %v258 = vshrl.u32 %v257, 7
        %v259 = vsub.s32 0, %v258
        %v260 = vrot.slane %v232, %v259
        %v261 = vlaneseq
        %v262 = vshrl.u32 %v261, 7
        %v263 = vsub.s32 0, %v262
        %v264 = vrot.slane %v233, %v263
        %v265 = vlaneseq
        %v266 = vshrl.u32 %v265, 7
        %v267 = vsub.s32 0, %v266
        %v268 = vrot.slane %v234, %v267
        %v269 = vlaneseq
        %v270 = vshrl.u32 %v269, 7
        %v271 = vsub.s32 0, %v270
        %v272 = vrot.slane %v235, %v271
        %v273 = vlaneseq
        %v274 = vshrl.u32 %v273, 7
        %v275 = vsub.s32 0, %v274
        %v276 = vrot.slane %v236, %v275
        %v285 = vmul.f32 %v213, %v248
        %v286 = vmul.f32 %v214, %v252
        %v287 = vmul.f32 %v215, %v256
        %v288 = vmul.f32 %v216, %v260
        %v289 = vmul.f32 %v217, %v264
        %v290 = vmul.f32 %v218, %v268
        %v291 = vmul.f32 %v219, %v272
        %v292 = vmul.f32 %v220, %v276
        %293 = vst [vmem:[%s201 + $0x8] sm:$0xff] %v285
        %294 = vst [vmem:[%s201 + $0x18] sm:$0xff] %v286
        %295 = vst [vmem:[%s201 + $0x28] sm:$0xff] %v287
        %296 = vst [vmem:[%s201 + $0x38] sm:$0xff] %v288
        %297 = vst [vmem:[%s201 + $0x48] sm:$0xff] %v289
        %298 = vst [vmem:[%s201 + $0x58] sm:$0xff] %v290
        %299 = vst [vmem:[%s201 + $0x68] sm:$0xff] %v291
        %300 = vst [vmem:[%s201 + $0x78] sm:$0xff] %v292
        %s301 = sand.u32 %s82, 1
        %s302 = scalar_lea.sflag [#allocation4], %s301
        %s303 = sand.u32 %s82, 1
        %s304 = smul.addr %s303, 128
        %s305 = scalar_lea.vmem [#allocation7], %s304
        // Predicated region
        $region37: #{tpu_custom_call.1} parent=27 // pred_check
          %p306 = pneg %p92
        $region38: #{tpu_custom_call.1} parent=27 // pred_check_branch
          %308 = sbr.rel (%p306) target = $region40
        $region39: #{tpu_custom_call.1} parent=27 // pred_region
          %s309 = smul.u32 8, %s22
          %s311 = ssub.s32 2048, 2048
          %312 = vsyncadd %s302, %s311
          %s313 = smul.addr %s309, 2
          %s314 = smul.addr %s313, 128
          %s315 = scalar_lea.hbm %s2, %s314
          %s316 = sshll.u32 %s305, 4
          %s317 = int_to_ptr.vmem [resolvable:$true] %s316
          %322 = dma.vmem_to_hbm [thread:$0]  %s317, 2048, %s315, %s302, 256, 256, 16
        $region40: #{tpu_custom_call.1} parent=27 // pred_fallthru
          _
      $region28: #{tpu_custom_call.1} parent=5 // pred_fallthru
        _
      %p323 = scmp.le.s32.totalorder 2, %s17
      // Predicated region
      $region41: #{tpu_custom_call.1} parent=5 // pred_check
        %p324 = pneg %p323
      $region42: #{tpu_custom_call.1} parent=5 // pred_check_branch
        %326 = sbr.rel (%p324) target = $region44
      $region43: #{tpu_custom_call.1} parent=5 // pred_region
        %s327 = ssub.s32 %s17, 2
        // Predicated region
        $region45: #{tpu_custom_call.1} parent=43 // pred_check
          %p328 = pneg %p98
        $region46: #{tpu_custom_call.1} parent=43 // pred_check_branch
          %330 = sbr.rel (%p328) target = $region48
        $region47: #{tpu_custom_call.1} parent=43 // pred_region
          %s331 = sand.u32 %s83, 1
          %s332 = scalar_lea.sflag [#allocation4], %s331
          %s333 = sand.u32 %s83, 1
          %s334 = smul.addr %s333, 128
          %s335 = scalar_lea.vmem [#allocation7], %s334
          %336 = dma.done %s332, 2048
        $region48: #{tpu_custom_call.1} parent=43 // pred_fallthru
          _
      $region44: #{tpu_custom_call.1} parent=5 // pred_fallthru
        _
    $region6: #{tpu_custom_call.1} parent=1 // loop_footer
      %s21 = sadd.s32 1, %s17
    $region7: #{tpu_custom_call.1} parent=1 // loop_footer_branch
      %16 = sbr.rel target = $region3
    $region8: #{tpu_custom_call.1} parent=1 // loop_exit
      _
    %337 = vsyncpa [#allocation3], 1
    %s338 = scalar_lea.sflag [#allocation3], 1
    %339 = vsyncpa %s338, 1
    %340 = vsyncpa [#allocation6], 1
    %s341 = scalar_lea.sflag [#allocation6], 1
    %342 = vsyncpa %s341, 1
    %343 = vsyncpa [#allocation4], 1
    %s344 = scalar_lea.sflag [#allocation4], 1
    %345 = vsyncpa %s344, 1

</llo_original>
